<compile_context>
chip_gen: v5e
topology: v5e:2x2
jax: 0.10.0
libtpu: 0.0.40
codegen_flags: <defaults>
</compile_context>

<pallas_src>
import math
import functools

import jax
import jax.numpy as jnp
from jax.experimental import pallas as pl
from jax.experimental.pallas import tpu as pltpu


def _round_up(n: int, m: int) -> int:
    return ((n + m - 1) // m) * m


# ---------------------------------------------------------------------------
# Kernel
# ---------------------------------------------------------------------------
def _dueling_dqn_kernel(*refs, num_feature_layers: int, combine: str,
                        num_actions: int, v_col: int):
    f32 = jnp.float32
    x_ref = refs[0]
    q_ref = refs[-1]
    trunk = refs[1:1 + 2 * num_feature_layers]
    wh_ref, bh_ref, w2_ref, b2_ref = refs[1 + 2 * num_feature_layers:-1]

    # --- feature trunk: (Linear -> ReLU) * num_feature_layers ---
    h = x_ref[...]
    for l in range(num_feature_layers):
        w_ref = trunk[2 * l]
        b_ref = trunk[2 * l + 1]
        h = jnp.dot(h.astype(w_ref.dtype), w_ref[...],
                    preferred_element_type=f32) + b_ref[...]
        h = jnp.maximum(h, 0.0)

    # --- fused value/advantage hidden layer: one (H, 2H) matmul ---
    hh = jnp.dot(h.astype(wh_ref.dtype), wh_ref[...],
                 preferred_element_type=f32) + bh_ref[...]
    hh = jnp.maximum(hh, 0.0)                  # (TB, 2H) = [v_hidden | a_hidden]

    # --- fused output head: single (2H, A_pad) matmul ---
    out2 = jnp.dot(hh.astype(w2_ref.dtype), w2_ref[...],
                   preferred_element_type=f32) + b2_ref[...]   # (TB, A_pad)

    if combine == "none":
        # "naive" / "average": the dueling combination is linear and was folded
        # into w2/b2 at pack time, so out2 already IS q in columns [0, A).
        q = out2
    else:
        # "max": columns [0, A) hold the pure advantage, column v_col the value.
        col = jax.lax.broadcasted_iota(jnp.int32, out2.shape, dimension=1)
        valid = col < num_actions
        v = jnp.sum(jnp.where(col == v_col, out2, 0.0), axis=-1, keepdims=True)
        m = jnp.max(jnp.where(valid, out2, -jnp.inf), axis=-1, keepdims=True)
        q = v + (out2 - m)

    q_ref[...] = q.astype(q_ref.dtype)


# ---------------------------------------------------------------------------
# Wrapper
# ---------------------------------------------------------------------------
def dueling_dqn_forward(x, params, dueling_type: str = "average",
                        compute_dtype=jnp.bfloat16, out_dtype=jnp.float32,
                        block_batch: int = 1024):
    """params = {"feature": [(w,b),...], "value": [(wv1,bv1),(wv2,bv2)],
                 "adv": [(wa1,ba1),(wa2,ba2)]}  (weights stored (in, out))."""
    assert dueling_type in {"average", "max", "naive"}
    batch, state_dim = x.shape
    feat = params["feature"]
    (wv1, bv1), (wv2, bv2) = params["value"]
    (wa1, ba1), (wa2, ba2) = params["adv"]
    H = wv1.shape[0]                      # last trunk width
    A = wa2.shape[1]                      # num_actions

    LANE = 128
    sub = 16 if jnp.dtype(compute_dtype).itemsize < 4 else 8
    K_pad = _round_up(state_dim, LANE)

    # ---- batch tile selection ----
    if batch <= 64:
        # latency path: one small tile, no 128-row padding waste
        TB = _round_up(max(batch, 1), sub)
    else:
        B128 = _round_up(batch, LANE)
        if B128 <= LANE:
            TB = LANE
        else:
            # largest tile <= block_batch that still yields >= 2 grid steps
            # (keeps both TensorCores busy on v7x, amortizes per-step overhead)
            TB = max(LANE, min(block_batch, _round_up(pl.cdiv(B128, 2), LANE)))
    B_pad = _round_up(max(batch, 1), TB)

    # ---- pack / pad params into lane-aligned, kernel-ready operands ----
    trunk_ops = []
    pad_rows = K_pad - state_dim          # only the first layer's K is padded
    for (w, b) in feat:
        wp = jnp.pad(w, ((0, pad_rows), (0, 0))).astype(compute_dtype)
        trunk_ops += [wp, b.reshape(1, -1).astype(jnp.float32)]
        pad_rows = 0

    # fused head hidden layer: (H, 2H)
    wh = jnp.concatenate([wv1, wa1], axis=1).astype(compute_dtype)
    bh = jnp.concatenate([bv1.reshape(1, -1), ba1.reshape(1, -1)],
                         axis=1).astype(jnp.float32)

    wv2c = wv2.reshape(H, 1).astype(jnp.float32)
    bv2c = bv2.reshape(1, 1).astype(jnp.float32)
    wa2c = wa2.astype(jnp.float32)
    ba2c = ba2.reshape(1, -1).astype(jnp.float32)

    if dueling_type == "max":
        # pure advantage in [0, A), pure value in spare padded column v_col
        v_col = A
        A_pad = _round_up(A + 1, LANE)
        w2 = jnp.zeros((2 * H, A_pad), jnp.float32)
        w2 = w2.at[H:, :A].set(wa2c)
        w2 = w2.at[:H, v_col].set(wv2c[:, 0])
        b2 = jnp.zeros((1, A_pad), jnp.float32)
        b2 = b2.at[:, :A].set(ba2c)
        b2 = b2.at[:, v_col].set(bv2c[0, 0])
        combine = "max"
    else:
        # "naive"/"average": fold value broadcast (+ mean-centring) into the
        # head weight so the kernel's last matmul directly emits q.
        v_col = -1
        A_pad = _round_up(A, LANE)
        if dueling_type == "average":
            wa2_eff = wa2c - jnp.mean(wa2c, axis=1, keepdims=True)
            ba2_eff = ba2c - jnp.mean(ba2c, axis=1, keepdims=True)
        else:  # naive
            wa2_eff, ba2_eff = wa2c, ba2c
        w2_real = jnp.concatenate(
            [jnp.broadcast_to(wv2c, (H, A)), wa2_eff], axis=0)   # (2H, A)
        b2_real = bv2c + ba2_eff                                  # (1, A)
        w2 = jnp.pad(w2_real, ((0, 0), (0, A_pad - A)))
        b2 = jnp.pad(b2_real, ((0, 0), (0, A_pad - A)))
        combine = "none"

    w2 = w2.astype(compute_dtype)
    b2 = b2.astype(jnp.float32)

    xp = jnp.pad(x, ((0, B_pad - batch),
                     (0, K_pad - state_dim))).astype(compute_dtype)

    head_ops = [wh, bh, w2, b2]
    inputs = [xp] + trunk_ops + head_ops

    const2 = lambda b: (0, 0)
    in_specs = [pl.BlockSpec((TB, K_pad), lambda b: (b, 0))]
    in_specs += [pl.BlockSpec(op.shape, const2) for op in trunk_ops + head_ops]
    out_spec = pl.BlockSpec((TB, A_pad), lambda b: (b, 0))

    # advisory cost estimate for the XLA scheduler
    flops = 0
    prev = K_pad
    for (w, _) in feat:
        flops += 2 * B_pad * prev * w.shape[1]
        prev = w.shape[1]
    flops += 2 * B_pad * H * (2 * H)          # fused head hidden
    flops += 2 * B_pad * (2 * H) * A_pad      # fused head output
    bytes_accessed = sum(int(a.size) * a.dtype.itemsize for a in inputs) \
        + B_pad * A_pad * jnp.dtype(out_dtype).itemsize

    kernel = functools.partial(
        _dueling_dqn_kernel,
        num_feature_layers=len(feat),
        combine=combine,
        num_actions=A,
        v_col=v_col,
    )

    q_pad = pl.pallas_call(
        kernel,
        out_shape=jax.ShapeDtypeStruct((B_pad, A_pad), out_dtype),
        grid=(B_pad // TB,),
        in_specs=in_specs,
        out_specs=out_spec,
        compiler_params=pltpu.CompilerParams(
            dimension_semantics=("parallel",)),
        cost_estimate=pl.CostEstimate(
            flops=int(flops), transcendentals=0,
            bytes_accessed=int(bytes_accessed)),
    )(*inputs)

    return q_pad[:batch, :A]


# ---------------------------------------------------------------------------
# Parameter init (matches the PyTorch module's init scheme; weights (in, out))
# ---------------------------------------------------------------------------
def _orthogonal(key, in_dim, out_dim, gain):
    a = jax.random.normal(key, (max(in_dim, out_dim), min(in_dim, out_dim)),
                          jnp.float32)
    q, r = jnp.linalg.qr(a)
    q = q * jnp.sign(jnp.diagonal(r))
    if in_dim < out_dim:
        q = q.T
    return (gain * q[:in_dim, :out_dim]).astype(jnp.float32)


def _default_linear(key, in_dim, out_dim):
    # PyTorch nn.Linear default init (kaiming-uniform a=sqrt(5) => U(+-1/sqrt(fan_in)))
    kw, kb = jax.random.split(key)
    bound = 1.0 / math.sqrt(in_dim)
    w = jax.random.uniform(kw, (in_dim, out_dim), jnp.float32, -bound, bound)
    b = jax.random.uniform(kb, (1, out_dim), jnp.float32, -bound, bound)
    return w, b


def init_params(key, state_dim, num_actions, hidden_dims=(128, 128)):
    n_feat = len(hidden_dims)
    keys = jax.random.split(key, n_feat + 4)
    g = math.sqrt(2.0)

    feature = []
    last = state_dim
    for i, h in enumerate(hidden_dims):
        w = _orthogonal(keys[i], last, h, g)
        b = jnp.zeros((1, h), jnp.float32)
        feature.append((w, b))
        last = h

    k = n_feat
    wv1, bv1 = _default_linear(keys[k], last, last); k += 1
    wv2 = _orthogonal(keys[k], last, 1, 1.0); k += 1
    bv2 = jnp.zeros((1, 1), jnp.float32)
    wa1, ba1 = _default_linear(keys[k], last, last); k += 1
    wa2 = _orthogonal(keys[k], last, num_actions, 0.01); k += 1
    ba2 = jnp.zeros((1, num_actions), jnp.float32)

    return {"feature": feature,
            "value": [(wv1, bv1), (wv2, bv2)],
            "adv": [(wa1, ba1), (wa2, ba2)]}


# ---------------------------------------------------------------------------
# Pure-JAX reference
# ---------------------------------------------------------------------------
def dueling_dqn_ref(x, params, dueling_type="average"):
    h = x
    for w, b in params["feature"]:
        h = jnp.maximum(h @ w + b, 0.0)
    (wv1, bv1), (wv2, bv2) = params["value"]
    (wa1, ba1), (wa2, ba2) = params["adv"]
    v = jnp.maximum(h @ wv1 + bv1, 0.0) @ wv2 + bv2
    a = jnp.maximum(h @ wa1 + ba1, 0.0) @ wa2 + ba2
    if dueling_type == "naive":
        return v + a
    if dueling_type == "average":
        return v + (a - jnp.mean(a, axis=1, keepdims=True))
    return v + (a - jnp.max(a, axis=1, keepdims=True))


if __name__ == "__main__":
    key = jax.random.PRNGKey(0)
    k_x, k_x2, k_p = jax.random.split(key, 3)

    state_dim, num_actions = 32, 8
    params = init_params(k_p, state_dim, num_actions, hidden_dims=(128, 128))

    # Small batch exercises the latency tile path (TB = round_up(batch, 8)).
    # f32 compute for exact parity with the pure-JAX reference.
    x = jax.random.normal(k_x, (8, state_dim), jnp.float32)
    for dt in ("average", "max", "naive"):
        q = jax.block_until_ready(dueling_dqn_forward(
            x, params, dueling_type=dt, compute_dtype=jnp.float32))
        q_ref = dueling_dqn_ref(x, params, dueling_type=dt)
        assert q.shape == (8, num_actions)
        assert jnp.allclose(q, q_ref, atol=5e-4, rtol=5e-4), f"mismatch ({dt})"

    # Larger batch exercises the multi-tile grid (>= 2 "parallel" steps,
    # batch padding).  batch=300 -> TB=256, grid=(2,).
    x2 = jax.random.normal(k_x2, (300, state_dim), jnp.float32)
    for dt in ("average", "max", "naive"):
        q2 = jax.block_until_ready(dueling_dqn_forward(
            x2, params, dueling_type=dt, compute_dtype=jnp.float32))
        q2_ref = dueling_dqn_ref(x2, params, dueling_type=dt)
        assert q2.shape == (300, num_actions)
        assert jnp.allclose(q2, q2_ref, atol=5e-4, rtol=5e-4), f"mismatch grid ({dt})"

    # Default bf16 compute path (fast MXU path); f32 accumulation inside.
    qb = jax.block_until_ready(
        dueling_dqn_forward(x2, params, dueling_type="average"))
    qb_ref = dueling_dqn_ref(x2, params, dueling_type="average")
    assert qb.shape == (300, num_actions)
    assert bool(jnp.all(jnp.isfinite(qb)))
    assert jnp.allclose(qb, qb_ref, atol=1e-1, rtol=1e-1), "bf16 mismatch"

    print("KERNEL_OK")
</pallas_src>

<mosaic_0001>
module attributes {stable_mosaic.version = 11 : i64} {
  func.func @_dueling_dqn_kernel(%arg0: i32, %arg1: memref<8x128xf32, #tpu.memory_space<vmem>>, %arg2: memref<128x128xf32, #tpu.memory_space<vmem>>, %arg3: memref<1x128xf32, #tpu.memory_space<vmem>>, %arg4: memref<128x128xf32, #tpu.memory_space<vmem>>, %arg5: memref<1x128xf32, #tpu.memory_space<vmem>>, %arg6: memref<128x256xf32, #tpu.memory_space<vmem>>, %arg7: memref<1x256xf32, #tpu.memory_space<vmem>>, %arg8: memref<256x128xf32, #tpu.memory_space<vmem>>, %arg9: memref<1x128xf32, #tpu.memory_space<vmem>>, %arg10: memref<8x128xf32, #tpu.memory_space<vmem>>) attributes {dimension_semantics = [#tpu.dimension_semantics<parallel>], iteration_bounds = array<i64: 1>, scalar_prefetch = 0 : i64, scratch_operands = 0 : i64, tpu.core_type = #tpu.core_type<tc>, window_params = [{transform_indices = @transform_0, window_bounds = array<i64: 8, 128>}, {pipeline_mode = #tpu.pipeline_mode<synchronous>, transform_indices = @transform_1, window_bounds = array<i64: 128, 128>}, {pipeline_mode = #tpu.pipeline_mode<synchronous>, transform_indices = @transform_2, window_bounds = array<i64: 1, 128>}, {pipeline_mode = #tpu.pipeline_mode<synchronous>, transform_indices = @transform_3, window_bounds = array<i64: 128, 128>}, {pipeline_mode = #tpu.pipeline_mode<synchronous>, transform_indices = @transform_4, window_bounds = array<i64: 1, 128>}, {pipeline_mode = #tpu.pipeline_mode<synchronous>, transform_indices = @transform_5, window_bounds = array<i64: 128, 256>}, {pipeline_mode = #tpu.pipeline_mode<synchronous>, transform_indices = @transform_6, window_bounds = array<i64: 1, 256>}, {pipeline_mode = #tpu.pipeline_mode<synchronous>, transform_indices = @transform_7, window_bounds = array<i64: 256, 128>}, {pipeline_mode = #tpu.pipeline_mode<synchronous>, transform_indices = @transform_8, window_bounds = array<i64: 1, 128>}, {transform_indices = @transform_9, window_bounds = array<i64: 8, 128>}]} {
    %c0 = arith.constant 0 : index
    %c0_0 = arith.constant 0 : index
    %0 = vector.load %arg1[%c0, %c0_0] : memref<8x128xf32, #tpu.memory_space<vmem>>, vector<8x128xf32>
    %c0_1 = arith.constant 0 : index
    %c0_2 = arith.constant 0 : index
    %1 = vector.load %arg2[%c0_1, %c0_2] : memref<128x128xf32, #tpu.memory_space<vmem>>, vector<128x128xf32>
    %cst = arith.constant dense<0.000000e+00> : vector<8x128xf32>
    %2 = tpu.matmul %0, %1, %cst {dimension_numbers = #tpu.dot_dimension_numbers<[1], [0], [0], [1], [0, 0, 1, 1], [], []>} : vector<8x128xf32>, vector<128x128xf32>, vector<8x128xf32> -> vector<8x128xf32>
    %c0_3 = arith.constant 0 : index
    %c0_4 = arith.constant 0 : index
    %3 = vector.load %arg3[%c0_3, %c0_4] : memref<1x128xf32, #tpu.memory_space<vmem>>, vector<1x128xf32>
    %4 = vector.broadcast %3 : vector<1x128xf32> to vector<8x128xf32>
    %5 = arith.addf %2, %4 : vector<8x128xf32>
    %cst_5 = arith.constant 0.000000e+00 : f32
    %6 = vector.broadcast %cst_5 : f32 to vector<8x128xf32>
    %7 = arith.maximumf %5, %6 : vector<8x128xf32>
    %c0_6 = arith.constant 0 : index
    %c0_7 = arith.constant 0 : index
    %8 = vector.load %arg4[%c0_6, %c0_7] : memref<128x128xf32, #tpu.memory_space<vmem>>, vector<128x128xf32>
    %cst_8 = arith.constant dense<0.000000e+00> : vector<8x128xf32>
    %9 = tpu.matmul %7, %8, %cst_8 {dimension_numbers = #tpu.dot_dimension_numbers<[1], [0], [0], [1], [0, 0, 1, 1], [], []>} : vector<8x128xf32>, vector<128x128xf32>, vector<8x128xf32> -> vector<8x128xf32>
    %c0_9 = arith.constant 0 : index
    %c0_10 = arith.constant 0 : index
    %10 = vector.load %arg5[%c0_9, %c0_10] : memref<1x128xf32, #tpu.memory_space<vmem>>, vector<1x128xf32>
    %11 = vector.broadcast %10 : vector<1x128xf32> to vector<8x128xf32>
    %12 = arith.addf %9, %11 : vector<8x128xf32>
    %cst_11 = arith.constant 0.000000e+00 : f32
    %13 = vector.broadcast %cst_11 : f32 to vector<8x128xf32>
    %14 = arith.maximumf %12, %13 : vector<8x128xf32>
    %c0_12 = arith.constant 0 : index
    %c0_13 = arith.constant 0 : index
    %15 = vector.load %arg6[%c0_12, %c0_13] : memref<128x256xf32, #tpu.memory_space<vmem>>, vector<128x256xf32>
    %cst_14 = arith.constant dense<0.000000e+00> : vector<8x256xf32>
    %16 = tpu.matmul %14, %15, %cst_14 {dimension_numbers = #tpu.dot_dimension_numbers<[1], [0], [0], [1], [0, 0, 1, 1], [], []>} : vector<8x128xf32>, vector<128x256xf32>, vector<8x256xf32> -> vector<8x256xf32>
    %c0_15 = arith.constant 0 : index
    %c0_16 = arith.constant 0 : index
    %17 = vector.load %arg7[%c0_15, %c0_16] : memref<1x256xf32, #tpu.memory_space<vmem>>, vector<1x256xf32>
    %18 = vector.broadcast %17 : vector<1x256xf32> to vector<8x256xf32>
    %19 = arith.addf %16, %18 : vector<8x256xf32>
    %cst_17 = arith.constant 0.000000e+00 : f32
    %20 = vector.broadcast %cst_17 : f32 to vector<8x256xf32>
    %21 = arith.maximumf %19, %20 : vector<8x256xf32>
    %c0_18 = arith.constant 0 : index
    %c0_19 = arith.constant 0 : index
    %22 = vector.load %arg8[%c0_18, %c0_19] : memref<256x128xf32, #tpu.memory_space<vmem>>, vector<256x128xf32>
    %cst_20 = arith.constant dense<0.000000e+00> : vector<8x128xf32>
    %23 = tpu.matmul %21, %22, %cst_20 {dimension_numbers = #tpu.dot_dimension_numbers<[1], [0], [0], [1], [0, 0, 1, 1], [], []>} : vector<8x256xf32>, vector<256x128xf32>, vector<8x128xf32> -> vector<8x128xf32>
    %c0_21 = arith.constant 0 : index
    %c0_22 = arith.constant 0 : index
    %24 = vector.load %arg9[%c0_21, %c0_22] : memref<1x128xf32, #tpu.memory_space<vmem>>, vector<1x128xf32>
    %25 = vector.broadcast %24 : vector<1x128xf32> to vector<8x128xf32>
    %26 = arith.addf %23, %25 : vector<8x128xf32>
    %c0_23 = arith.constant 0 : index
    %c0_24 = arith.constant 0 : index
    %27 = vector.load %arg10[%c0_23, %c0_24] : memref<8x128xf32, #tpu.memory_space<vmem>>, vector<8x128xf32>
    tpu.vector_store %arg10[%c0_23, %c0_24], %26 {strides = array<i32>} : memref<8x128xf32, #tpu.memory_space<vmem>>, vector<8x128xf32>,
    return
  }
  func.func @transform_0(%arg0: i32) -> (i32, i32) {
    %c0_i32 = arith.constant 0 : i32
    %c0_i32_0 = arith.constant 0 : i32
    return %arg0, %c0_i32 : i32, i32
  }
  func.func @transform_1(%arg0: i32) -> (i32, i32) {
    %c0_i32 = arith.constant 0 : i32
    %c0_i32_0 = arith.constant 0 : i32
    %c0_i32_1 = arith.constant 0 : i32
    return %c0_i32, %c0_i32_0 : i32, i32
  }
  func.func @transform_2(%arg0: i32) -> (i32, i32) {
    %c0_i32 = arith.constant 0 : i32
    %c0_i32_0 = arith.constant 0 : i32
    %c0_i32_1 = arith.constant 0 : i32
    return %c0_i32, %c0_i32_0 : i32, i32
  }
  func.func @transform_3(%arg0: i32) -> (i32, i32) {
    %c0_i32 = arith.constant 0 : i32
    %c0_i32_0 = arith.constant 0 : i32
    %c0_i32_1 = arith.constant 0 : i32
    return %c0_i32, %c0_i32_0 : i32, i32
  }
  func.func @transform_4(%arg0: i32) -> (i32, i32) {
    %c0_i32 = arith.constant 0 : i32
    %c0_i32_0 = arith.constant 0 : i32
    %c0_i32_1 = arith.constant 0 : i32
    return %c0_i32, %c0_i32_0 : i32, i32
  }
  func.func @transform_5(%arg0: i32) -> (i32, i32) {
    %c0_i32 = arith.constant 0 : i32
    %c0_i32_0 = arith.constant 0 : i32
    %c0_i32_1 = arith.constant 0 : i32
    return %c0_i32, %c0_i32_0 : i32, i32
  }
  func.func @transform_6(%arg0: i32) -> (i32, i32) {
    %c0_i32 = arith.constant 0 : i32
    %c0_i32_0 = arith.constant 0 : i32
    %c0_i32_1 = arith.constant 0 : i32
    return %c0_i32, %c0_i32_0 : i32, i32
  }
  func.func @transform_7(%arg0: i32) -> (i32, i32) {
    %c0_i32 = arith.constant 0 : i32
    %c0_i32_0 = arith.constant 0 : i32
    %c0_i32_1 = arith.constant 0 : i32
    return %c0_i32, %c0_i32_0 : i32, i32
  }
  func.func @transform_8(%arg0: i32) -> (i32, i32) {
    %c0_i32 = arith.constant 0 : i32
    %c0_i32_0 = arith.constant 0 : i32
    %c0_i32_1 = arith.constant 0 : i32
    return %c0_i32, %c0_i32_0 : i32, i32
  }
  func.func @transform_9(%arg0: i32) -> (i32, i32) {
    %c0_i32 = arith.constant 0 : i32
    %c0_i32_0 = arith.constant 0 : i32
    return %arg0, %c0_i32 : i32, i32
  }
}

</mosaic_0001>

<llo_original>
// kernel: tpu_custom_call.1
$region0: #{tpu_custom_call.1}
  #allocation0 [shape = 'u32[]', space=smem, size = 0x4, offset = 0x4, fixed_abs, tag = 'smem constant byte address 0x4 - core index']
  #allocation1 [shape = 'u32[72,128]{1,0:T(1,128)}', space=vmem, size = 0x9000, scoped, tag = 'internal scratch']
  %s0 = inlined_call_operand.hbm [shape: f32[8,128], index: 0, kind: input, shape index: {}]
  %s1 = inlined_call_operand.hbm [shape: f32[128,128], index: 1, kind: input, shape index: {}]
  %s2 = inlined_call_operand.vmem [shape: f32[1,128], index: 2, kind: input, shape index: {}]
  %s3 = inlined_call_operand.hbm [shape: f32[128,128], index: 3, kind: input, shape index: {}]
  %s4 = inlined_call_operand.hbm [shape: f32[1,128], index: 4, kind: input, shape index: {}]
  %s5 = inlined_call_operand.hbm [shape: f32[128,256], index: 5, kind: input, shape index: {}]
  %s6 = inlined_call_operand.vmem [shape: f32[1,256], index: 6, kind: input, shape index: {}]
  %s7 = inlined_call_operand.hbm [shape: f32[256,128], index: 7, kind: input, shape index: {}]
  %s8 = inlined_call_operand.vmem [shape: f32[1,128], index: 8, kind: input, shape index: {}]
  %s9 = inlined_call_operand.hbm [shape: f32[8,128], index: 9, kind: output, shape index: {}]
  %s10 = sld [smem:[#allocation0]]
  $region70: #{tpu_custom_call.1} parent=0
    _
  %s12 = ssub.s32 1, %s10
  %s13 = scalar_select 0, %s12, %s10
  $region1: #{tpu_custom_call.1} parent=0
    #allocation2 [shape = 'u8[4096]{0}', space=vmem, size = 0x1000, scoped, tag = 'input window, operand 0, single buffered']
    #allocation3 [shape = 's32[1]{0}', space=sflag, size = 0x4, scoped, tag = 'scoped memory for tpu_custom_call.1']
    #allocation4 [shape = 's32[1]{0}', space=sflag, size = 0x4, scoped, tag = 'scoped memory for tpu_custom_call.1']
    #allocation5 [shape = 'u8[65536]{0}', space=vmem, size = 0x10000, scoped, tag = 'input window, operand 1, single buffered']
    #allocation6 [shape = 's32[1]{0}', space=sflag, size = 0x4, scoped, tag = 'scoped memory for tpu_custom_call.1']
    #allocation7 [shape = 'u8[65536]{0}', space=vmem, size = 0x10000, scoped, tag = 'input window, operand 3, single buffered']
    #allocation8 [shape = 'u8[512]{0}', space=vmem, size = 0x400, scoped, tag = 'input window, operand 4, single buffered']
    #allocation9 [shape = 's32[1]{0}', space=sflag, size = 0x4, scoped, tag = 'scoped memory for tpu_custom_call.1']
    #allocation10 [shape = 'u8[131072]{0}', space=vmem, size = 0x20000, scoped, tag = 'input window, operand 5, single buffered']
    #allocation11 [shape = 'u8[131072]{0}', space=vmem, size = 0x20000, scoped, tag = 'input window, operand 7, single buffered']
    #allocation12 [shape = 's32[1]{0}', space=sflag, size = 0x4, scoped, tag = 'scoped memory for tpu_custom_call.1']
    #allocation13 [shape = 'u8[4096]{0}', space=vmem, size = 0x1000, scoped, tag = 'output window, operand 0, single buffered']
    %14 = vsyncpa [#allocation3], 0
    %15 = vsyncpa [#allocation6], 0
    %16 = vsyncpa [#allocation9], 0
    %17 = vsyncpa [#allocation12], 0
    %18 = vsyncpa [#allocation4], 0
    // Predicated region
    $region2: #{tpu_custom_call.1} parent=1 // pred_check
      _
    $region3: #{tpu_custom_call.1} parent=1 // pred_check_branch
      %20 = sbr.rel (0) target = $region5
    $region4: #{tpu_custom_call.1} parent=1 // pred_region
      %22 = vsyncadd [#allocation3], 0
      %s24 = sshll.u32 %s0, 4
      %s25 = int_to_ptr.hbm [resolvable:$true] %s24
      %s26 = sshll.u32 [#allocation2], 4
      %s27 = int_to_ptr.vmem [resolvable:$true] %s26
      %29 = dma.hbm_to_vmem [thread:$0]  %s25, 128, %s27, [#allocation3]
    $region5: #{tpu_custom_call.1} parent=1 // pred_fallthru
      _
    // Predicated region
    $region6: #{tpu_custom_call.1} parent=1 // pred_check
      _
    $region7: #{tpu_custom_call.1} parent=1 // pred_check_branch
      %31 = sbr.rel (0) target = $region9
    $region8: #{tpu_custom_call.1} parent=1 // pred_region
      %33 = vsyncadd [#allocation6], 0
      %s34 = sshll.u32 %s1, 4
      %s35 = int_to_ptr.hbm [resolvable:$true] %s34
      %s36 = sshll.u32 [#allocation5], 4
      %s37 = int_to_ptr.vmem [resolvable:$true] %s36
      %42 = dma.hbm_to_vmem [thread:$0]  %s35, 2048, %s37, [#allocation6], 128, 128, 8
    $region9: #{tpu_custom_call.1} parent=1 // pred_fallthru
      _
    // Predicated region
    $region10: #{tpu_custom_call.1} parent=1 // pred_check
      _
    $region11: #{tpu_custom_call.1} parent=1 // pred_check_branch
      %44 = sbr.rel (0) target = $region13
    $region12: #{tpu_custom_call.1} parent=1 // pred_region
      _
    $region13: #{tpu_custom_call.1} parent=1 // pred_fallthru
      _
    // Predicated region
    $region14: #{tpu_custom_call.1} parent=1 // pred_check
      _
    $region15: #{tpu_custom_call.1} parent=1 // pred_check_branch
      %46 = sbr.rel (0) target = $region17
    $region16: #{tpu_custom_call.1} parent=1 // pred_region
      %48 = vsyncadd [#allocation6], 0
      %s49 = sshll.u32 %s3, 4
      %s50 = int_to_ptr.hbm [resolvable:$true] %s49
      %s51 = sshll.u32 [#allocation7], 4
      %s52 = int_to_ptr.vmem [resolvable:$true] %s51
      %57 = dma.hbm_to_vmem [thread:$0]  %s50, 2048, %s52, [#allocation6], 128, 128, 8
    $region17: #{tpu_custom_call.1} parent=1 // pred_fallthru
      _
    // Predicated region
    $region18: #{tpu_custom_call.1} parent=1 // pred_check
      _
    $region19: #{tpu_custom_call.1} parent=1 // pred_check_branch
      %59 = sbr.rel (0) target = $region21
    $region20: #{tpu_custom_call.1} parent=1 // pred_region
      %61 = vsyncadd [#allocation9], 0
      %s63 = sshll.u32 %s4, 4
      %s64 = int_to_ptr.hbm [resolvable:$true] %s63
      %s65 = sshll.u32 [#allocation8], 4
      %s66 = int_to_ptr.vmem [resolvable:$true] %s65
      %68 = dma.hbm_to_vmem [thread:$0]  %s64, 16, %s66, [#allocation9]
    $region21: #{tpu_custom_call.1} parent=1 // pred_fallthru
      _
    // Predicated region
    $region22: #{tpu_custom_call.1} parent=1 // pred_check
      _
    $region23: #{tpu_custom_call.1} parent=1 // pred_check_branch
      %70 = sbr.rel (0) target = $region25
    $region24: #{tpu_custom_call.1} parent=1 // pred_region
      %72 = vsyncadd [#allocation9], 0
      %s73 = sshll.u32 %s5, 4
      %s74 = int_to_ptr.hbm [resolvable:$true] %s73
      %s75 = sshll.u32 [#allocation10], 4
      %s76 = int_to_ptr.vmem [resolvable:$true] %s75
      %81 = dma.hbm_to_vmem [thread:$0]  %s74, 4096, %s76, [#allocation9], 256, 256, 16
    $region25: #{tpu_custom_call.1} parent=1 // pred_fallthru
      _
    // Predicated region
    $region26: #{tpu_custom_call.1} parent=1 // pred_check
      _
    $region27: #{tpu_custom_call.1} parent=1 // pred_check_branch
      %83 = sbr.rel (0) target = $region29
    $region28: #{tpu_custom_call.1} parent=1 // pred_region
      _
    $region29: #{tpu_custom_call.1} parent=1 // pred_fallthru
      _
    // Predicated region
    $region30: #{tpu_custom_call.1} parent=1 // pred_check
      _
    $region31: #{tpu_custom_call.1} parent=1 // pred_check_branch
      %85 = sbr.rel (0) target = $region33
    $region32: #{tpu_custom_call.1} parent=1 // pred_region
      %87 = vsyncadd [#allocation12], 0
      %s88 = sshll.u32 %s7, 4
      %s89 = int_to_ptr.hbm [resolvable:$true] %s88
      %s90 = sshll.u32 [#allocation11], 4
      %s91 = int_to_ptr.vmem [resolvable:$true] %s90
      %96 = dma.hbm_to_vmem [thread:$0]  %s89, 4096, %s91, [#allocation12], 128, 128, 8
    $region33: #{tpu_custom_call.1} parent=1 // pred_fallthru
      _
    // Predicated region
    $region34: #{tpu_custom_call.1} parent=1 // pred_check
      _
    $region35: #{tpu_custom_call.1} parent=1 // pred_check_branch
      %98 = sbr.rel (0) target = $region37
    $region36: #{tpu_custom_call.1} parent=1 // pred_region
      _
    $region37: #{tpu_custom_call.1} parent=1 // pred_fallthru
      _
    // Predicated region
    $region38: #{tpu_custom_call.1} parent=1 // pred_check
      _
    $region39: #{tpu_custom_call.1} parent=1 // pred_check_branch
      %100 = sbr.rel (0) target = $region41
    $region40: #{tpu_custom_call.1} parent=1 // pred_region
      %102 = dma.done [#allocation3], 128
    $region41: #{tpu_custom_call.1} parent=1 // pred_fallthru
      _
    // Predicated region
    $region42: #{tpu_custom_call.1} parent=1 // pred_check
      _
    $region43: #{tpu_custom_call.1} parent=1 // pred_check_branch
      %104 = sbr.rel (0) target = $region45
    $region44: #{tpu_custom_call.1} parent=1 // pred_region
      %106 = dma.done [#allocation6], 2048
    $region45: #{tpu_custom_call.1} parent=1 // pred_fallthru
      _
    // Predicated region
    $region46: #{tpu_custom_call.1} parent=1 // pred_check
      _
    $region47: #{tpu_custom_call.1} parent=1 // pred_check_branch
      %108 = sbr.rel (0) target = $region49
    $region48: #{tpu_custom_call.1} parent=1 // pred_region
      %110 = dma.done [#allocation6], 2048
    $region49: #{tpu_custom_call.1} parent=1 // pred_fallthru
      _
    // Predicated region
    $region50: #{tpu_custom_call.1} parent=1 // pred_check
      _
    $region51: #{tpu_custom_call.1} parent=1 // pred_check_branch
      %112 = sbr.rel (0) target = $region53
    $region52: #{tpu_custom_call.1} parent=1 // pred_region
      %114 = dma.done [#allocation9], 16
    $region53: #{tpu_custom_call.1} parent=1 // pred_fallthru
      _
    // Predicated region
    $region54: #{tpu_custom_call.1} parent=1 // pred_check
      _
    $region55: #{tpu_custom_call.1} parent=1 // pred_check_branch
      %116 = sbr.rel (0) target = $region57
    $region56: #{tpu_custom_call.1} parent=1 // pred_region
      %118 = dma.done [#allocation9], 4096
    $region57: #{tpu_custom_call.1} parent=1 // pred_fallthru
      _
    // Predicated region
    $region58: #{tpu_custom_call.1} parent=1 // pred_check
      _
    $region59: #{tpu_custom_call.1} parent=1 // pred_check_branch
      %120 = sbr.rel (0) target = $region61
    $region60: #{tpu_custom_call.1} parent=1 // pred_region
      %122 = dma.done [#allocation12], 4096
    $region61: #{tpu_custom_call.1} parent=1 // pred_fallthru
      _
    %v123 = vld [vmem:[#allocation2] sm:$0xff]
    %v124 = vld [vmem:[#allocation5] sm:$0xff]
    %v125 = vld [vmem:[#allocation5 + $0x8] sm:$0xff]
    %v126 = vld [vmem:[#allocation5 + $0x10] sm:$0xff]
    %v127 = vld [vmem:[#allocation5 + $0x18] sm:$0xff]
    %v128 = vld [vmem:[#allocation5 + $0x20] sm:$0xff]
    %v129 = vld [vmem:[#allocation5 + $0x28] sm:$0xff]
    %v130 = vld [vmem:[#allocation5 + $0x30] sm:$0xff]
    %v131 = vld [vmem:[#allocation5 + $0x38] sm:$0xff]
    %v132 = vld [vmem:[#allocation5 + $0x40] sm:$0xff]
    %v133 = vld [vmem:[#allocation5 + $0x48] sm:$0xff]
    %v134 = vld [vmem:[#allocation5 + $0x50] sm:$0xff]
    %v135 = vld [vmem:[#allocation5 + $0x58] sm:$0xff]
    %v136 = vld [vmem:[#allocation5 + $0x60] sm:$0xff]
    %v137 = vld [vmem:[#allocation5 + $0x68] sm:$0xff]
    %v138 = vld [vmem:[#allocation5 + $0x70] sm:$0xff]
    %v139 = vld [vmem:[#allocation5 + $0x78] sm:$0xff]
    %v140 = vld [vmem:[%s2] sm:$0x1]
    %v142 = vperm.slane %v140, 0
    %144 = vmatpush.msra.mxu0 %v139
    %145 = vmatpush.msra.mxu0 %v138
    %146 = vmatpush.msra.mxu0 %v137
    %147 = vmatpush.msra.mxu0 %v136
    %148 = vmatpush.msra.mxu0 %v135
    %149 = vmatpush.msra.mxu0 %v134
    %150 = vmatpush.msra.mxu0 %v133
    %151 = vmatpush.msra.mxu0 %v132
    %152 = vmatpush.msra.mxu0 %v131
    %153 = vmatpush.msra.mxu0 %v130
    %154 = vmatpush.msra.mxu0 %v129
    %155 = vmatpush.msra.mxu0 %v128
    %156 = vmatpush.msra.mxu0 %v127
    %157 = vmatpush.msra.mxu0 %v126
    %158 = vmatpush.msra.mxu0 %v125
    %159 = vmatpush.msra.mxu0 %v124
    %160 = vmatmul.f32.gmra.mxu0 %v123
    %v161 = vpop.f32.mrf.mxu0
    %v162 = vadd.f32 %v142, %v161
    %163 = vdwg.mxu0
    %v164 = vmax.f32 %v162, 0.0
    %v165 = vld [vmem:[#allocation7] sm:$0xff]
    %v166 = vld [vmem:[#allocation7 + $0x8] sm:$0xff]
    %v167 = vld [vmem:[#allocation7 + $0x10] sm:$0xff]
    %v168 = vld [vmem:[#allocation7 + $0x18] sm:$0xff]
    %v169 = vld [vmem:[#allocation7 + $0x20] sm:$0xff]
    %v170 = vld [vmem:[#allocation7 + $0x28] sm:$0xff]
    %v171 = vld [vmem:[#allocation7 + $0x30] sm:$0xff]
    %v172 = vld [vmem:[#allocation7 + $0x38] sm:$0xff]
    %v173 = vld [vmem:[#allocation7 + $0x40] sm:$0xff]
    %v174 = vld [vmem:[#allocation7 + $0x48] sm:$0xff]
    %v175 = vld [vmem:[#allocation7 + $0x50] sm:$0xff]
    %v176 = vld [vmem:[#allocation7 + $0x58] sm:$0xff]
    %v177 = vld [vmem:[#allocation7 + $0x60] sm:$0xff]
    %v178 = vld [vmem:[#allocation7 + $0x68] sm:$0xff]
    %v179 = vld [vmem:[#allocation7 + $0x70] sm:$0xff]
    %v180 = vld [vmem:[#allocation7 + $0x78] sm:$0xff]
    %v181 = vld [vmem:[#allocation8] sm:$0x1]
    %v183 = vperm.slane %v181, 0
    %185 = vmatpush.msra.mxu0 %v180
    %186 = vmatpush.msra.mxu0 %v179
    %187 = vmatpush.msra.mxu0 %v178
    %188 = vmatpush.msra.mxu0 %v177
    %189 = vmatpush.msra.mxu0 %v176
    %190 = vmatpush.msra.mxu0 %v175
    %191 = vmatpush.msra.mxu0 %v174
    %192 = vmatpush.msra.mxu0 %v173
    %193 = vmatpush.msra.mxu0 %v172
    %194 = vmatpush.msra.mxu0 %v171
    %195 = vmatpush.msra.mxu0 %v170
    %196 = vmatpush.msra.mxu0 %v169
    %197 = vmatpush.msra.mxu0 %v168
    %198 = vmatpush.msra.mxu0 %v167
    %199 = vmatpush.msra.mxu0 %v166
    %200 = vmatpush.msra.mxu0 %v165
    %201 = vmatmul.f32.gmra.mxu0 %v164
    %v202 = vpop.f32.mrf.mxu0
    %v203 = vadd.f32 %v183, %v202
    %204 = vdwg.mxu0
    %v205 = vmax.f32 %v203, 0.0
    %v206 = vld [vmem:[#allocation10] sm:$0xff]
    %v207 = vld [vmem:[#allocation10 + $0x8] sm:$0xff]
    %v208 = vld [vmem:[#allocation10 + $0x10] sm:$0xff]
    %v209 = vld [vmem:[#allocation10 + $0x18] sm:$0xff]
    %v210 = vld [vmem:[#allocation10 + $0x20] sm:$0xff]
    %v211 = vld [vmem:[#allocation10 + $0x28] sm:$0xff]
    %v212 = vld [vmem:[#allocation10 + $0x30] sm:$0xff]
    %v213 = vld [vmem:[#allocation10 + $0x38] sm:$0xff]
    %v214 = vld [vmem:[#allocation10 + $0x40] sm:$0xff]
    %v215 = vld [vmem:[#allocation10 + $0x48] sm:$0xff]
    %v216 = vld [vmem:[#allocation10 + $0x50] sm:$0xff]
    %v217 = vld [vmem:[#allocation10 + $0x58] sm:$0xff]
    %v218 = vld [vmem:[#allocation10 + $0x60] sm:$0xff]
    %v219 = vld [vmem:[#allocation10 + $0x68] sm:$0xff]
    %v220 = vld [vmem:[#allocation10 + $0x70] sm:$0xff]
    %v221 = vld [vmem:[#allocation10 + $0x78] sm:$0xff]
    %v222 = vld [vmem:[#allocation10 + $0x80] sm:$0xff]
    %v223 = vld [vmem:[#allocation10 + $0x88] sm:$0xff]
    %v224 = vld [vmem:[#allocation10 + $0x90] sm:$0xff]
    %v225 = vld [vmem:[#allocation10 + $0x98] sm:$0xff]
    %v226 = vld [vmem:[#allocation10 + $0xa0] sm:$0xff]
    %v227 = vld [vmem:[#allocation10 + $0xa8] sm:$0xff]
    %v228 = vld [vmem:[#allocation10 + $0xb0] sm:$0xff]
    %v229 = vld [vmem:[#allocation10 + $0xb8] sm:$0xff]
    %v230 = vld [vmem:[#allocation10 + $0xc0] sm:$0xff]
    %v231 = vld [vmem:[#allocation10 + $0xc8] sm:$0xff]
    %v232 = vld [vmem:[#allocation10 + $0xd0] sm:$0xff]
    %v233 = vld [vmem:[#allocation10 + $0xd8] sm:$0xff]
    %v234 = vld [vmem:[#allocation10 + $0xe0] sm:$0xff]
    %v235 = vld [vmem:[#allocation10 + $0xe8] sm:$0xff]
    %v236 = vld [vmem:[#allocation10 + $0xf0] sm:$0xff]
    %v237 = vld [vmem:[#allocation10 + $0xf8] sm:$0xff]
    %v238 = vld [vmem:[%s6] sm:$0x3]
    %v240 = vperm.slane %v238, 0
    %v241 = vperm.slane %v238, 1
    %244 = vmatpush.msra.mxu0 %v236
    %245 = vmatpush.msra.mxu0 %v234
    %246 = vmatpush.msra.mxu0 %v232
    %247 = vmatpush.msra.mxu0 %v230
    %248 = vmatpush.msra.mxu0 %v228
    %249 = vmatpush.msra.mxu0 %v226
    %250 = vmatpush.msra.mxu0 %v224
    %251 = vmatpush.msra.mxu0 %v222
    %252 = vmatpush.msra.mxu0 %v220
    %253 = vmatpush.msra.mxu0 %v218
    %254 = vmatpush.msra.mxu0 %v216
    %255 = vmatpush.msra.mxu0 %v214
    %256 = vmatpush.msra.mxu0 %v212
    %257 = vmatpush.msra.mxu0 %v210
    %258 = vmatpush.msra.mxu0 %v208
    %259 = vmatpush.msra.mxu0 %v206
    %260 = vmatmul.f32.gmra.mxu0 %v205
    %v261 = vpop.f32.mrf.mxu0
    %v262 = vadd.f32 %v240, %v261
    %263 = vdwg.mxu0
    %264 = vmatpush.msra.mxu0 %v237
    %265 = vmatpush.msra.mxu0 %v235
    %266 = vmatpush.msra.mxu0 %v233
    %267 = vmatpush.msra.mxu0 %v231
    %268 = vmatpush.msra.mxu0 %v229
    %269 = vmatpush.msra.mxu0 %v227
    %270 = vmatpush.msra.mxu0 %v225
    %271 = vmatpush.msra.mxu0 %v223
    %272 = vmatpush.msra.mxu0 %v221
    %273 = vmatpush.msra.mxu0 %v219
    %274 = vmatpush.msra.mxu0 %v217
    %275 = vmatpush.msra.mxu0 %v215
    %276 = vmatpush.msra.mxu0 %v213
    %277 = vmatpush.msra.mxu0 %v211
    %278 = vmatpush.msra.mxu0 %v209
    %279 = vmatpush.msra.mxu0 %v207
    %280 = vmatmul.f32.gmra.mxu0 %v205
    %v281 = vpop.f32.mrf.mxu0
    %v282 = vadd.f32 %v241, %v281
    %283 = vdwg.mxu0
    %v284 = vmax.f32 %v262, 0.0
    %v285 = vmax.f32 %v282, 0.0
    %v286 = vld [vmem:[#allocation11] sm:$0xff]
    %v287 = vld [vmem:[#allocation11 + $0x8] sm:$0xff]
    %v288 = vld [vmem:[#allocation11 + $0x10] sm:$0xff]
    %v289 = vld [vmem:[#allocation11 + $0x18] sm:$0xff]
    %v290 = vld [vmem:[#allocation11 + $0x20] sm:$0xff]
    %v291 = vld [vmem:[#allocation11 + $0x28] sm:$0xff]
    %v292 = vld [vmem:[#allocation11 + $0x30] sm:$0xff]
    %v293 = vld [vmem:[#allocation11 + $0x38] sm:$0xff]
    %v294 = vld [vmem:[#allocation11 + $0x40] sm:$0xff]
    %v295 = vld [vmem:[#allocation11 + $0x48] sm:$0xff]
    %v296 = vld [vmem:[#allocation11 + $0x50] sm:$0xff]
    %v297 = vld [vmem:[#allocation11 + $0x58] sm:$0xff]
    %v298 = vld [vmem:[#allocation11 + $0x60] sm:$0xff]
    %v299 = vld [vmem:[#allocation11 + $0x68] sm:$0xff]
    %v300 = vld [vmem:[#allocation11 + $0x70] sm:$0xff]
    %v301 = vld [vmem:[#allocation11 + $0x78] sm:$0xff]
    %v302 = vld [vmem:[#allocation11 + $0x80] sm:$0xff]
    %v303 = vld [vmem:[#allocation11 + $0x88] sm:$0xff]
    %v304 = vld [vmem:[#allocation11 + $0x90] sm:$0xff]
    %v305 = vld [vmem:[#allocation11 + $0x98] sm:$0xff]
    %v306 = vld [vmem:[#allocation11 + $0xa0] sm:$0xff]
    %v307 = vld [vmem:[#allocation11 + $0xa8] sm:$0xff]
    %v308 = vld [vmem:[#allocation11 + $0xb0] sm:$0xff]
    %v309 = vld [vmem:[#allocation11 + $0xb8] sm:$0xff]
    %v310 = vld [vmem:[#allocation11 + $0xc0] sm:$0xff]
    %v311 = vld [vmem:[#allocation11 + $0xc8] sm:$0xff]
    %v312 = vld [vmem:[#allocation11 + $0xd0] sm:$0xff]
    %v313 = vld [vmem:[#allocation11 + $0xd8] sm:$0xff]
    %v314 = vld [vmem:[#allocation11 + $0xe0] sm:$0xff]
    %v315 = vld [vmem:[#allocation11 + $0xe8] sm:$0xff]
    %v316 = vld [vmem:[#allocation11 + $0xf0] sm:$0xff]
    %v317 = vld [vmem:[#allocation11 + $0xf8] sm:$0xff]
    %v318 = vld [vmem:[%s8] sm:$0x1]
    %v320 = vperm.slane %v318, 0
    %322 = vmatpush.msra.mxu0 %v301
    %323 = vmatpush.msra.mxu0 %v300
    %324 = vmatpush.msra.mxu0 %v299
    %325 = vmatpush.msra.mxu0 %v298
    %326 = vmatpush.msra.mxu0 %v297
    %327 = vmatpush.msra.mxu0 %v296
    %328 = vmatpush.msra.mxu0 %v295
    %329 = vmatpush.msra.mxu0 %v294
    %330 = vmatpush.msra.mxu0 %v293
    %331 = vmatpush.msra.mxu0 %v292
    %332 = vmatpush.msra.mxu0 %v291
    %333 = vmatpush.msra.mxu0 %v290
    %334 = vmatpush.msra.mxu0 %v289
    %335 = vmatpush.msra.mxu0 %v288
    %336 = vmatpush.msra.mxu0 %v287
    %337 = vmatpush.msra.mxu0 %v286
    %338 = vmatmul.f32.gmra.mxu0 %v284
    %v339 = vpop.f32.mrf.mxu0
    %v340 = vadd.f32 %v320, %v339
    %341 = vdwg.mxu0
    %342 = vmatpush.msra.mxu0 %v317
    %343 = vmatpush.msra.mxu0 %v316
    %344 = vmatpush.msra.mxu0 %v315
    %345 = vmatpush.msra.mxu0 %v314
    %346 = vmatpush.msra.mxu0 %v313
    %347 = vmatpush.msra.mxu0 %v312
    %348 = vmatpush.msra.mxu0 %v311
    %349 = vmatpush.msra.mxu0 %v310
    %350 = vmatpush.msra.mxu0 %v309
    %351 = vmatpush.msra.mxu0 %v308
    %352 = vmatpush.msra.mxu0 %v307
    %353 = vmatpush.msra.mxu0 %v306
    %354 = vmatpush.msra.mxu0 %v305
    %355 = vmatpush.msra.mxu0 %v304
    %356 = vmatpush.msra.mxu0 %v303
    %357 = vmatpush.msra.mxu0 %v302
    %358 = vmatmul.f32.gmra.mxu0 %v285
    %v359 = vpop.f32.mrf.mxu0
    %v360 = vadd.f32 %v340, %v359
    %361 = vdwg.mxu0
    %362 = vst [vmem:[#allocation13] sm:$0xff] %v360
    // Predicated region
    $region62: #{tpu_custom_call.1} parent=1 // pred_check
      _
    $region63: #{tpu_custom_call.1} parent=1 // pred_check_branch
      %364 = sbr.rel (0) target = $region65
    $region64: #{tpu_custom_call.1} parent=1 // pred_region
      %366 = vsyncadd [#allocation4], 0
      %s368 = sshll.u32 [#allocation13], 4
      %s369 = int_to_ptr.vmem [resolvable:$true] %s368
      %s370 = sshll.u32 %s9, 4
      %s371 = int_to_ptr.hbm [resolvable:$true] %s370
      %373 = dma.vmem_to_hbm [thread:$0]  %s369, 128, %s371, [#allocation4]
    $region65: #{tpu_custom_call.1} parent=1 // pred_fallthru
      _
    // Predicated region
    $region66: #{tpu_custom_call.1} parent=1 // pred_check
      _
    $region67: #{tpu_custom_call.1} parent=1 // pred_check_branch
      %375 = sbr.rel (0) target = $region69
    $region68: #{tpu_custom_call.1} parent=1 // pred_region
      %377 = dma.done [#allocation4], 128
    $region69: #{tpu_custom_call.1} parent=1 // pred_fallthru
      _
    %378 = vsyncpa [#allocation3], 1
    %379 = vsyncpa [#allocation6], 1
    %380 = vsyncpa [#allocation9], 1
    %381 = vsyncpa [#allocation12], 1
    %382 = vsyncpa [#allocation4], 1

</llo_original>
